<compile_context>
chip_gen: v5e
topology: v5e:2x2
jax: 0.10.0
libtpu: 0.0.40
codegen_flags: <defaults>
</compile_context>

<pallas_src>
import jax
import jax.numpy as jnp
from jax.experimental import pallas as pl
from jax.experimental.pallas import tpu as pltpu


def _make_gcn_kernel(skip: bool):
    def kernel(x_k_ref, x_i_ref, adj_ref, w_ref, b_ref, o_ref, acc_ref):
        # x_k_ref: (TK, in_dim)  -- node tile for this contraction step
        # x_i_ref: (TM, in_dim)  -- node tile for this output row tile (skip term)
        # adj_ref: (TM, TK)
        # w_ref:   (in_dim, out_dim)
        # b_ref:   (1, out_dim) f32
        # o_ref:   (TM, out_dim)
        # acc_ref: (TM, out_dim) f32 scratch
        k = pl.program_id(2)

        @pl.when(k == 0)
        def _init():
            bias = b_ref[...].astype(jnp.float32)                    # (1, out_dim)
            if skip:
                # Fold skip connection (x[i_tile] @ W) and bias into the accumulator
                # init so they are added exactly once per output tile.
                acc_ref[...] = bias + jnp.dot(
                    x_i_ref[...], w_ref[...], preferred_element_type=jnp.float32)
            else:
                acc_ref[...] = jnp.broadcast_to(bias, acc_ref.shape)

        # support for this contraction tile of nodes: (TK, out_dim), f32 accumulate.
        support_k = jnp.dot(x_k_ref[...], w_ref[...],
                            preferred_element_type=jnp.float32)
        # adj[i_tile, k_tile] @ support_k -> accumulate in f32.  Cast support back to
        # the compute dtype so both matmuls ride the (bf16) MXU path.
        acc_ref[...] += jnp.dot(adj_ref[...], support_k.astype(x_k_ref.dtype),
                                preferred_element_type=jnp.float32)

        @pl.when(k == pl.num_programs(2) - 1)
        def _writeback():
            o_ref[...] = acc_ref[...].astype(o_ref.dtype)

    return kernel


def _pick_tile(n, candidates):
    """Largest candidate tile that evenly divides n; falls back to the full extent
    (a full-extent block is always a legal BlockSpec size)."""
    for c in candidates:
        if n % c == 0:
            return c
    return n


def graph_convolution(x, adj, weight, bias, *, skip=True,
                      compute_dtype=jnp.bfloat16, tm=None, tk=None):
    """Pallas TPU implementation of GraphConvolution.forward.

    x:      (B, N, in_dim)
    adj:    (B, N, N)
    weight: (in_dim, out_dim)
    bias:   (out_dim,)
    returns (B, N, out_dim) in x.dtype
    """
    B, N, in_dim = x.shape
    assert adj.shape == (B, N, N), "adj must be (B, N, N)"
    assert weight.shape[0] == in_dim
    out_dim = weight.shape[1]
    out_dtype = x.dtype

    # Tile sizes: modest tiles that stay far inside scoped VMEM on v5e/v6e/v7x.
    # TM: row tile (sublane axis, multiple of 8).  TK: contraction tile over adj
    # columns (lane axis, multiple of 128).  Fall back to full N for small graphs.
    tm = tm if tm is not None else _pick_tile(N, (256, 128, 64, 32, 16, 8))
    tk = tk if tk is not None else _pick_tile(N, (512, 256, 128))
    assert N % tm == 0 and N % tk == 0, "tile sizes must divide N"
    assert (tm % 8 == 0) or (tm == N)
    assert (tk % 128 == 0) or (tk == N)

    # bf16 (or requested dtype) for the streamed operands; bias stays f32.
    xc = x.astype(compute_dtype)
    adjc = adj.astype(compute_dtype)
    wc = weight.astype(compute_dtype)
    bias2d = bias.reshape(1, out_dim).astype(jnp.float32)

    i_steps = N // tm
    k_steps = N // tk
    grid = (B, i_steps, k_steps)

    csize = jnp.dtype(compute_dtype).itemsize
    osize = jnp.dtype(out_dtype).itemsize
    flops = (2 * B * N * N * out_dim
             + 2 * B * N * in_dim * out_dim * (i_steps + (1 if skip else 0)))
    bytes_accessed = (B * N * N * csize                       # adj, read once
                      + B * N * in_dim * csize * (i_steps + 1)  # x (k-stream + i-stream)
                      + in_dim * out_dim * csize
                      + out_dim * 4
                      + B * N * out_dim * osize)
    cost = pl.CostEstimate(flops=flops, transcendentals=0,
                           bytes_accessed=bytes_accessed)

    return pl.pallas_call(
        _make_gcn_kernel(skip),
        out_shape=jax.ShapeDtypeStruct((B, N, out_dim), out_dtype),
        grid_spec=pltpu.PrefetchScalarGridSpec(
            num_scalar_prefetch=0,
            grid=grid,
            in_specs=[
                # x[k_tile]: feeds per-tile support recompute
                pl.BlockSpec((pl.Squeezed(), tk, in_dim), lambda b, i, k: (b, k, 0)),
                # x[i_tile]: feeds the skip connection (same array, row-tile view)
                pl.BlockSpec((pl.Squeezed(), tm, in_dim), lambda b, i, k: (b, i, 0)),
                # adj[i_tile, k_tile]
                pl.BlockSpec((pl.Squeezed(), tm, tk), lambda b, i, k: (b, i, k)),
                # weight / bias: whole array, resident across the grid
                pl.BlockSpec((in_dim, out_dim), lambda b, i, k: (0, 0)),
                pl.BlockSpec((1, out_dim), lambda b, i, k: (0, 0)),
            ],
            out_specs=pl.BlockSpec((pl.Squeezed(), tm, out_dim),
                                   lambda b, i, k: (b, i, 0)),
            scratch_shapes=[pltpu.VMEM((tm, out_dim), jnp.float32)],
        ),
        compiler_params=pltpu.CompilerParams(
            dimension_semantics=("parallel", "parallel", "arbitrary"),
        ),
        cost_estimate=cost,
    )(xc, xc, adjc, wc, bias2d)


def _reference(x, adj, w, b, skip=True):
    """Plain-JAX reference (near-exact f32)."""
    hp = jax.lax.Precision.HIGHEST
    support = jnp.einsum("bni,io->bno", x, w, precision=hp)
    out = jnp.einsum("bnm,bmo->bno", adj, support, precision=hp) + b[None, None, :]
    if skip:
        out = out + support
    return out


def _reference_bf16(x, adj, w, b, skip=True):
    """Reference mirroring the kernel's bf16-input / f32-accumulate arithmetic."""
    xb, ab, wb = (t.astype(jnp.bfloat16) for t in (x, adj, w))
    support = jnp.einsum("bni,io->bno", xb, wb,
                         preferred_element_type=jnp.float32)
    out = jnp.einsum("bnm,bmo->bno", ab, support.astype(jnp.bfloat16),
                     preferred_element_type=jnp.float32) + b[None, None, :]
    if skip:
        out = out + support
    return out


if __name__ == "__main__":
    key = jax.random.PRNGKey(0)
    kx, ka, kw, kb, kx2, ka2 = jax.random.split(key, 6)

    # --- small demo shapes (consistent with the module's toy usage) ----------
    B, N, in_dim, out_dim = 2, 16, 32, 32
    x = jax.random.normal(kx, (B, N, in_dim), dtype=jnp.float32)
    adj = jax.random.normal(ka, (B, N, N), dtype=jnp.float32)
    # torch.Tensor(...) params are uninitialized; use small deterministic normals.
    weight = jax.random.normal(kw, (in_dim, out_dim), dtype=jnp.float32) * 0.1
    bias = jax.random.normal(kb, (out_dim,), dtype=jnp.float32) * 0.1

    # f32 compute path: exact module semantics.
    out_f32 = jax.block_until_ready(
        graph_convolution(x, adj, weight, bias, compute_dtype=jnp.float32))
    ref_f32 = _reference(x, adj, weight, bias)
    assert out_f32.shape == (B, N, out_dim)
    assert jnp.allclose(out_f32, ref_f32, atol=5e-2, rtol=1e-2), "f32 path mismatch"

    # bf16 compute path (default): compare against a bf16-mirrored reference.
    out_bf16 = jax.block_until_ready(graph_convolution(x, adj, weight, bias))
    ref_b = _reference_bf16(x, adj, weight, bias)
    assert jnp.allclose(out_bf16, ref_b.astype(out_bf16.dtype),
                        atol=1e-2, rtol=1e-2), "bf16 path mismatch"

    # --- larger shape exercising the (B, N//TM, N//TK) tiling + k accumulator ---
    N2 = 256
    x2 = jax.random.normal(kx2, (B, N2, in_dim), dtype=jnp.float32)
    adj2 = jax.random.normal(ka2, (B, N2, N2), dtype=jnp.float32)
    out2 = jax.block_until_ready(
        graph_convolution(x2, adj2, weight, bias, tm=128, tk=128))  # grid (2, 2, 2)
    ref2 = _reference_bf16(x2, adj2, weight, bias)
    assert out2.shape == (B, N2, out_dim)
    assert jnp.allclose(out2, ref2.astype(out2.dtype),
                        atol=2e-2, rtol=1e-2), "tiled bf16 path mismatch"

    print("KERNEL_OK")
</pallas_src>

<mosaic_0001>
module attributes {stable_mosaic.version = 11 : i64} {
  func.func @kernel(%arg0: i32, %arg1: i32, %arg2: i32, %arg3: memref<1x16x32xf32, #tpu.memory_space<vmem>>, %arg4: memref<1x16x32xf32, #tpu.memory_space<vmem>>, %arg5: memref<1x16x16xf32, #tpu.memory_space<vmem>>, %arg6: memref<32x32xf32, #tpu.memory_space<vmem>>, %arg7: memref<1x32xf32, #tpu.memory_space<vmem>>, %arg8: memref<1x16x32xf32, #tpu.memory_space<vmem>>, %arg9: memref<16x32xf32, #tpu.memory_space<vmem>>) attributes {dimension_semantics = [#tpu.dimension_semantics<parallel>, #tpu.dimension_semantics<parallel>, #tpu.dimension_semantics<arbitrary>], iteration_bounds = array<i64: 2, 1, 1>, scalar_prefetch = 0 : i64, scratch_operands = 1 : i64, tpu.core_type = #tpu.core_type<tc>, window_params = [{transform_indices = @transform_0, window_bounds = array<i64: 1, 16, 32>}, {transform_indices = @transform_1, window_bounds = array<i64: 1, 16, 32>}, {transform_indices = @transform_2, window_bounds = array<i64: 1, 16, 16>}, {pipeline_mode = #tpu.pipeline_mode<synchronous>, transform_indices = @transform_3, window_bounds = array<i64: 32, 32>}, {pipeline_mode = #tpu.pipeline_mode<synchronous>, transform_indices = @transform_4, window_bounds = array<i64: 1, 32>}, {transform_indices = @transform_5, window_bounds = array<i64: 1, 16, 32>}]} {
    %c0_i32 = arith.constant 0 : i32
    %0 = arith.cmpi eq, %arg2, %c0_i32 : i32
    %1 = arith.extui %0 : i1 to i32
    %c0_i32_0 = arith.constant 0 : i32
    %2 = arith.cmpi ne, %1, %c0_i32_0 : i32
    scf.if %2 {
      %c0_15 = arith.constant 0 : index
      %c0_16 = arith.constant 0 : index
      %16 = vector.load %arg7[%c0_15, %c0_16] : memref<1x32xf32, #tpu.memory_space<vmem>>, vector<1x32xf32>
      %c0_17 = arith.constant 0 : index
      %c0_18 = arith.constant 0 : index
      %c0_19 = arith.constant 0 : index
      %17 = vector.load %arg4[%c0_17, %c0_18, %c0_19] : memref<1x16x32xf32, #tpu.memory_space<vmem>>, vector<1x16x32xf32>
      %18 = vector.shape_cast %17 : vector<1x16x32xf32> to vector<16x32xf32>
      %c0_20 = arith.constant 0 : index
      %c0_21 = arith.constant 0 : index
      %19 = vector.load %arg6[%c0_20, %c0_21] : memref<32x32xf32, #tpu.memory_space<vmem>>, vector<32x32xf32>
      %cst_22 = arith.constant dense<0.000000e+00> : vector<16x32xf32>
      %20 = tpu.matmul %18, %19, %cst_22 {dimension_numbers = #tpu.dot_dimension_numbers<[1], [0], [0], [1], [0, 0, 1, 1], [], []>} : vector<16x32xf32>, vector<32x32xf32>, vector<16x32xf32> -> vector<16x32xf32>
      %21 = vector.broadcast %16 : vector<1x32xf32> to vector<16x32xf32>
      %22 = arith.addf %21, %20 : vector<16x32xf32>
      %c0_23 = arith.constant 0 : index
      %c0_24 = arith.constant 0 : index
      %23 = vector.load %arg9[%c0_23, %c0_24] : memref<16x32xf32, #tpu.memory_space<vmem>>, vector<16x32xf32>
      tpu.vector_store %arg9[%c0_23, %c0_24], %22 {strides = array<i32>} : memref<16x32xf32, #tpu.memory_space<vmem>>, vector<16x32xf32>,
    } else {
    }
    %c0 = arith.constant 0 : index
    %c0_1 = arith.constant 0 : index
    %c0_2 = arith.constant 0 : index
    %3 = vector.load %arg3[%c0, %c0_1, %c0_2] : memref<1x16x32xf32, #tpu.memory_space<vmem>>, vector<1x16x32xf32>
    %4 = vector.shape_cast %3 : vector<1x16x32xf32> to vector<16x32xf32>
    %c0_3 = arith.constant 0 : index
    %c0_4 = arith.constant 0 : index
    %5 = vector.load %arg6[%c0_3, %c0_4] : memref<32x32xf32, #tpu.memory_space<vmem>>, vector<32x32xf32>
    %cst = arith.constant dense<0.000000e+00> : vector<16x32xf32>
    %6 = tpu.matmul %4, %5, %cst {dimension_numbers = #tpu.dot_dimension_numbers<[1], [0], [0], [1], [0, 0, 1, 1], [], []>} : vector<16x32xf32>, vector<32x32xf32>, vector<16x32xf32> -> vector<16x32xf32>
    %c0_5 = arith.constant 0 : index
    %c0_6 = arith.constant 0 : index
    %7 = vector.load %arg9[%c0_5, %c0_6] : memref<16x32xf32, #tpu.memory_space<vmem>>, vector<16x32xf32>
    %c0_7 = arith.constant 0 : index
    %c0_8 = arith.constant 0 : index
    %c0_9 = arith.constant 0 : index
    %8 = vector.load %arg5[%c0_7, %c0_8, %c0_9] : memref<1x16x16xf32, #tpu.memory_space<vmem>>, vector<1x16x16xf32>
    %9 = vector.shape_cast %8 : vector<1x16x16xf32> to vector<16x16xf32>
    %cst_10 = arith.constant dense<0.000000e+00> : vector<16x32xf32>
    %10 = tpu.matmul %9, %6, %cst_10 {dimension_numbers = #tpu.dot_dimension_numbers<[1], [0], [0], [1], [0, 0, 1, 1], [], []>} : vector<16x16xf32>, vector<16x32xf32>, vector<16x32xf32> -> vector<16x32xf32>
    %11 = arith.addf %7, %10 : vector<16x32xf32>
    %c0_11 = arith.constant 0 : index
    %c0_12 = arith.constant 0 : index
    %12 = vector.load %arg9[%c0_11, %c0_12] : memref<16x32xf32, #tpu.memory_space<vmem>>, vector<16x32xf32>
    tpu.vector_store %arg9[%c0_11, %c0_12], %11 {strides = array<i32>} : memref<16x32xf32, #tpu.memory_space<vmem>>, vector<16x32xf32>,
    %c0_i32_13 = arith.constant 0 : i32
    %13 = arith.cmpi eq, %arg2, %c0_i32_13 : i32
    %14 = arith.extui %13 : i1 to i32
    %c0_i32_14 = arith.constant 0 : i32
    %15 = arith.cmpi ne, %14, %c0_i32_14 : i32
    scf.if %15 {
      %c0_15 = arith.constant 0 : index
      %c0_16 = arith.constant 0 : index
      %16 = vector.load %arg9[%c0_15, %c0_16] : memref<16x32xf32, #tpu.memory_space<vmem>>, vector<16x32xf32>
      %c0_17 = arith.constant 0 : index
      %c0_18 = arith.constant 0 : index
      %c0_19 = arith.constant 0 : index
      %17 = vector.load %arg8[%c0_17, %c0_18, %c0_19] : memref<1x16x32xf32, #tpu.memory_space<vmem>>, vector<1x16x32xf32>
      %18 = vector.shape_cast %17 : vector<1x16x32xf32> to vector<16x32xf32>
      %19 = vector.shape_cast %16 : vector<16x32xf32> to vector<1x16x32xf32>
      tpu.vector_store %arg8[%c0_17, %c0_18, %c0_19], %19 {strides = array<i32>} : memref<1x16x32xf32, #tpu.memory_space<vmem>>, vector<1x16x32xf32>,
    } else {
    }
    return
  }
  func.func @transform_0(%arg0: i32, %arg1: i32, %arg2: i32) -> (i32, i32, i32) {
    %c0_i32 = arith.constant 0 : i32
    %c0_i32_0 = arith.constant 0 : i32
    return %arg0, %arg2, %c0_i32 : i32, i32, i32
  }
  func.func @transform_1(%arg0: i32, %arg1: i32, %arg2: i32) -> (i32, i32, i32) {
    %c0_i32 = arith.constant 0 : i32
    %c0_i32_0 = arith.constant 0 : i32
    return %arg0, %arg1, %c0_i32 : i32, i32, i32
  }
  func.func @transform_2(%arg0: i32, %arg1: i32, %arg2: i32) -> (i32, i32, i32) {
    %c0_i32 = arith.constant 0 : i32
    return %arg0, %arg1, %arg2 : i32, i32, i32
  }
  func.func @transform_3(%arg0: i32, %arg1: i32, %arg2: i32) -> (i32, i32) {
    %c0_i32 = arith.constant 0 : i32
    %c0_i32_0 = arith.constant 0 : i32
    %c0_i32_1 = arith.constant 0 : i32
    return %c0_i32, %c0_i32_0 : i32, i32
  }
  func.func @transform_4(%arg0: i32, %arg1: i32, %arg2: i32) -> (i32, i32) {
    %c0_i32 = arith.constant 0 : i32
    %c0_i32_0 = arith.constant 0 : i32
    %c0_i32_1 = arith.constant 0 : i32
    return %c0_i32, %c0_i32_0 : i32, i32
  }
  func.func @transform_5(%arg0: i32, %arg1: i32, %arg2: i32) -> (i32, i32, i32) {
    %c0_i32 = arith.constant 0 : i32
    %c0_i32_0 = arith.constant 0 : i32
    return %arg0, %arg1, %c0_i32 : i32, i32, i32
  }
}

</mosaic_0001>

<llo_original>
// kernel: tpu_custom_call.1
$region0: #{tpu_custom_call.1}
  #allocation0 [shape = 'u32[]', space=smem, size = 0x4, offset = 0x4, fixed_abs, tag = 'smem constant byte address 0x4 - core index']
  #allocation1 [shape = 'u32[72,128]{1,0:T(1,128)}', space=vmem, size = 0x9000, scoped, tag = 'internal scratch']
  #allocation2 [shape = 'f32[16,32]{1,0:T(8,128)}', space=vmem, size = 0x2000, scoped, tag = 'scratch operand']
  %s0 = inlined_call_operand.hbm [shape: f32[2,16,32], index: 0, kind: input, shape index: {}]
  %s1 = inlined_call_operand.hbm [shape: f32[2,16,32], index: 1, kind: input, shape index: {}]
  %s2 = inlined_call_operand.hbm [shape: f32[2,16,16], index: 2, kind: input, shape index: {}]
  %s3 = inlined_call_operand.hbm [shape: f32[32,32], index: 3, kind: input, shape index: {}]
  %s4 = inlined_call_operand.vmem [shape: f32[1,32], index: 4, kind: input, shape index: {}]
  %s5 = inlined_call_operand.hbm [shape: f32[2,16,32], index: 5, kind: output, shape index: {}]
  %s6 = sld [smem:[#allocation0]]
  $region77: #{tpu_custom_call.1} parent=0
    _
  %s8 = ssub.s32 1, %s6
  %s9 = scalar_select 0, %s8, %s6
  $region1: #{tpu_custom_call.1} parent=0
    #allocation3 [shape = 'u8[16384]{0}', space=vmem, size = 0x4000, scoped, tag = 'input window, operand 0']
    #allocation4 [shape = 's32[2]{0}', space=sflag, size = 0x8, scoped, tag = 'scoped memory for tpu_custom_call.1']
    #allocation5 [shape = 's32[2]{0}', space=sflag, size = 0x8, scoped, tag = 'scoped memory for tpu_custom_call.1']
    #allocation6 [shape = 'u8[16384]{0}', space=vmem, size = 0x4000, scoped, tag = 'input window, operand 1']
    #allocation7 [shape = 's32[2]{0}', space=sflag, size = 0x8, scoped, tag = 'scoped memory for tpu_custom_call.1']
    #allocation8 [shape = 'u8[16384]{0}', space=vmem, size = 0x4000, scoped, tag = 'input window, operand 2']
    #allocation9 [shape = 'u8[16384]{0}', space=vmem, size = 0x4000, scoped, tag = 'input window, operand 3, single buffered']
    #allocation10 [shape = 's32[1]{0}', space=sflag, size = 0x4, scoped, tag = 'scoped memory for tpu_custom_call.1']
    #allocation11 [shape = 'u8[16384]{0}', space=vmem, size = 0x4000, scoped, tag = 'output window, operand 0']
    %10 = vsyncpa [#allocation4], 0
    %s11 = scalar_lea.sflag [#allocation4], 1
    %12 = vsyncpa %s11, 0
    %13 = vsyncpa [#allocation7], 0
    %s14 = scalar_lea.sflag [#allocation7], 1
    %15 = vsyncpa %s14, 0
    %16 = vsyncpa [#allocation10], 0
    %17 = vsyncpa [#allocation5], 0
    %s18 = scalar_lea.sflag [#allocation5], 1
    %19 = vsyncpa %s18, 0
    loop: start=0, step=1, limit=4
    $region2: #{tpu_custom_call.1} parent=1 // loop_pre_header
      _
    $region3: #{tpu_custom_call.1} parent=1 // loop_header
      %s21 = sphi 0, %s25
      %p22 = scmp.ge.s32.totalorder %s21, 4
      %s28 = sphi 0, %s47
      %s29 = sphi 0, %s43
      %s30 = sphi 0, %s39
      %s31 = sphi 0, %s28
      %s32 = sphi 0, %s29
      %s33 = sphi 0, %s30
      %s34 = sphi 0, %s31
      %s35 = sphi 0, %s32
      %s36 = sphi 0, %s33
      %s52 = sphi 0, %s54
      %s55 = sphi 0, %s52
      %s56 = sphi 0, %s55
      %s72 = sphi 0, %s56
      %s80 = sphi 0, %s82
      %s83 = sphi 0, %s80
      %s84 = sphi 0, %s83
      %s100 = sphi 0, %s84
      %s110 = sphi 0, %s112
      %s113 = sphi 0, %s110
      %s114 = sphi 0, %s113
      %s130 = sphi 0, %s114
      %s134 = sphi 0, %s134
      %s136 = sphi 0, %s134
      %s137 = sphi 0, %s136
      %s151 = sphi 0, %s137
      %s155 = sphi 0, %s155
      %s157 = sphi 0, %s155
      %s158 = sphi 0, %s157
      %s172 = sphi 0, %s158
      %s180 = sphi 0, %s182
      %s183 = sphi 0, %s180
      %s184 = sphi 0, %s183
      %s200 = sphi 0, %s184
    $region4: #{tpu_custom_call.1} parent=1 // loop_header_branch
      %24 = sbr.rel (%p22) target = $region8
    $region5: #{tpu_custom_call.1} parent=1 // loop_body
      %s26 = ssub.s32 %s21, 1
      %s27 = ssub.s32 %s21, 2
      %s37 = sadd.s32 1, %s30
      %p38 = scmp.ge.s32.totalorder %s37, 1
      %s39 = scalar_select %p38, 0, %s37
      %s40 = sadd.s32 1, %s29
      %s41 = scalar_select %p38, %s40, %s29
      %p42 = scmp.ge.s32.totalorder %s41, 1
      %s43 = scalar_select %p42, 0, %s41
      %s44 = sadd.s32 1, %s28
      %s45 = scalar_select %p42, %s44, %s28
      %p46 = scmp.ge.s32.totalorder %s45, 2
      %s47 = scalar_select %p46, 0, %s45
      %s48 = ssub.s32 %s28, %s47
      %s49 = ssub.s32 %s30, %s39
      %s50 = sor.u32 %s48, %s49
      %p51 = scmp.eq.s32.totalorder %s50, 0
      %s53 = sadd.s32 %s52, 1
      %s54 = scalar_select %p51, %s52, %s53
      %p57 = pneg %p51
      %p58 = scmp.eq.s32.totalorder %s21, 1
      %p59 = por %p57, %p58
      %p60 = scmp.ne.s32.totalorder %s52, %s55
      %p61 = scmp.eq.s32.totalorder %s21, 0
      %p62 = por %p60, %p61
      %p63 = scmp.ne.s32.totalorder %s52, %s55
      %p64 = scmp.eq.s32.totalorder %s26, 1
      %p65 = por %p63, %p64
      %p66 = scmp.ne.s32.totalorder %s55, %s56
      %p67 = scmp.eq.s32.totalorder %s26, 0
      %p68 = por %p66, %p67
      %p69 = scmp.ne.s32.totalorder %s55, %s56
      %p70 = scmp.eq.s32.totalorder %s27, 1
      %p71 = por %p69, %p70
      %p73 = scmp.ne.s32.totalorder %s56, %s72
      %p74 = scmp.eq.s32.totalorder %s27, 0
      %p75 = por %p73, %p74
      %s76 = ssub.s32 %s28, %s47
      %s77 = ssub.s32 %s29, %s43
      %s78 = sor.u32 %s76, %s77
      %p79 = scmp.eq.s32.totalorder %s78, 0
      %s81 = sadd.s32 %s80, 1
      %s82 = scalar_select %p79, %s80, %s81
      %p85 = pneg %p79
      %p86 = scmp.eq.s32.totalorder %s21, 1
      %p87 = por %p85, %p86
      %p88 = scmp.ne.s32.totalorder %s80, %s83
      %p89 = scmp.eq.s32.totalorder %s21, 0
      %p90 = por %p88, %p89
      %p91 = scmp.ne.s32.totalorder %s80, %s83
      %p92 = scmp.eq.s32.totalorder %s26, 1
      %p93 = por %p91, %p92
      %p94 = scmp.ne.s32.totalorder %s83, %s84
      %p95 = scmp.eq.s32.totalorder %s26, 0
      %p96 = por %p94, %p95
      %p97 = scmp.ne.s32.totalorder %s83, %s84
      %p98 = scmp.eq.s32.totalorder %s27, 1
      %p99 = por %p97, %p98
      %p101 = scmp.ne.s32.totalorder %s84, %s100
      %p102 = scmp.eq.s32.totalorder %s27, 0
      %p103 = por %p101, %p102
      %s104 = ssub.s32 %s28, %s47
      %s105 = ssub.s32 %s29, %s43
      %s106 = sor.u32 %s104, %s105
      %s107 = ssub.s32 %s30, %s39
      %s108 = sor.u32 %s106, %s107
      %p109 = scmp.eq.s32.totalorder %s108, 0
      %s111 = sadd.s32 %s110, 1
      %s112 = scalar_select %p109, %s110, %s111
      %p115 = pneg %p109
      %p116 = scmp.eq.s32.totalorder %s21, 1
      %p117 = por %p115, %p116
      %p118 = scmp.ne.s32.totalorder %s110, %s113
      %p119 = scmp.eq.s32.totalorder %s21, 0
      %p120 = por %p118, %p119
      %p121 = scmp.ne.s32.totalorder %s110, %s113
      %p122 = scmp.eq.s32.totalorder %s26, 1
      %p123 = por %p121, %p122
      %p124 = scmp.ne.s32.totalorder %s113, %s114
      %p125 = scmp.eq.s32.totalorder %s26, 0
      %p126 = por %p124, %p125
      %p127 = scmp.ne.s32.totalorder %s113, %s114
      %p128 = scmp.eq.s32.totalorder %s27, 1
      %p129 = por %p127, %p128
      %p131 = scmp.ne.s32.totalorder %s114, %s130
      %p132 = scmp.eq.s32.totalorder %s27, 0
      %p133 = por %p131, %p132
      %s135 = sadd.s32 %s134, 1
      %p138 = scmp.eq.s32.totalorder %s21, 1
      %p139 = scmp.ne.s32.totalorder %s134, %s136
      %p140 = scmp.eq.s32.totalorder %s21, 0
      %p141 = por %p139, %p140
      %p142 = scmp.ne.s32.totalorder %s134, %s136
      %p143 = scmp.eq.s32.totalorder %s26, 1
      %p144 = por %p142, %p143
      %p145 = scmp.ne.s32.totalorder %s136, %s137
      %p146 = scmp.eq.s32.totalorder %s26, 0
      %p147 = por %p145, %p146
      %p148 = scmp.ne.s32.totalorder %s136, %s137
      %p149 = scmp.eq.s32.totalorder %s27, 1
      %p150 = por %p148, %p149
      %p152 = scmp.ne.s32.totalorder %s137, %s151
      %p153 = scmp.eq.s32.totalorder %s27, 0
      %p154 = por %p152, %p153
      %s156 = sadd.s32 %s155, 1
      %p159 = scmp.eq.s32.totalorder %s21, 1
      %p160 = scmp.ne.s32.totalorder %s155, %s157
      %p161 = scmp.eq.s32.totalorder %s21, 0
      %p162 = por %p160, %p161
      %p163 = scmp.ne.s32.totalorder %s155, %s157
      %p164 = scmp.eq.s32.totalorder %s26, 1
      %p165 = por %p163, %p164
      %p166 = scmp.ne.s32.totalorder %s157, %s158
      %p167 = scmp.eq.s32.totalorder %s26, 0
      %p168 = por %p166, %p167
      %p169 = scmp.ne.s32.totalorder %s157, %s158
      %p170 = scmp.eq.s32.totalorder %s27, 1
      %p171 = por %p169, %p170
      %p173 = scmp.ne.s32.totalorder %s158, %s172
      %p174 = scmp.eq.s32.totalorder %s27, 0
      %p175 = por %p173, %p174
      %s176 = ssub.s32 %s28, %s47
      %s177 = ssub.s32 %s29, %s43
      %s178 = sor.u32 %s176, %s177
      %p179 = scmp.eq.s32.totalorder %s178, 0
      %s181 = sadd.s32 %s180, 1
      %s182 = scalar_select %p179, %s180, %s181
      %p185 = pneg %p179
      %p186 = scmp.eq.s32.totalorder %s21, 1
      %p187 = por %p185, %p186
      %p188 = scmp.ne.s32.totalorder %s180, %s183
      %p189 = scmp.eq.s32.totalorder %s21, 0
      %p190 = por %p188, %p189
      %p191 = scmp.ne.s32.totalorder %s180, %s183
      %p192 = scmp.eq.s32.totalorder %s26, 1
      %p193 = por %p191, %p192
      %p194 = scmp.ne.s32.totalorder %s183, %s184
      %p195 = scmp.eq.s32.totalorder %s26, 0
      %p196 = por %p194, %p195
      %p197 = scmp.ne.s32.totalorder %s183, %s184
      %p198 = scmp.eq.s32.totalorder %s27, 1
      %p199 = por %p197, %p198
      %p201 = scmp.ne.s32.totalorder %s184, %s200
      %p202 = scmp.eq.s32.totalorder %s27, 0
      %p203 = por %p201, %p202
      %p204 = scmp.le.s32.totalorder 1, %s21
      %p205 = scmp.lt.s32.totalorder %s21, 3
      %p206 = pnand %p204, %p205
      %p207 = pneg %p206
      // Predicated region
      $region9: #{tpu_custom_call.1} parent=5 // pred_check
        _
      $region10: #{tpu_custom_call.1} parent=5 // pred_check_branch
        %209 = sbr.rel (%p206) target = $region12
      $region11: #{tpu_custom_call.1} parent=5 // pred_region
        %s210 = ssub.s32 %s21, 1
        // Predicated region
        $region13: #{tpu_custom_call.1} parent=11 // pred_check
          %p211 = pneg %p147
        $region14: #{tpu_custom_call.1} parent=11 // pred_check_branch
          %213 = sbr.rel (%p211) target = $region16
        $region15: #{tpu_custom_call.1} parent=11 // pred_region
          %215 = vsyncadd [#allocation10], 0
          %s216 = sshll.u32 %s3, 4
          %s217 = int_to_ptr.hbm [resolvable:$true] %s216
          %s218 = sshll.u32 [#allocation9], 4
          %s219 = int_to_ptr.vmem [resolvable:$true] %s218
          %224 = dma.hbm_to_vmem [thread:$0]  %s217, 512, %s219, [#allocation10], 128, 128, 8
        $region16: #{tpu_custom_call.1} parent=11 // pred_fallthru
          _
        // Predicated region
        $region17: #{tpu_custom_call.1} parent=11 // pred_check
          %p225 = pneg %p168
        $region18: #{tpu_custom_call.1} parent=11 // pred_check_branch
          %227 = sbr.rel (%p225) target = $region20
        $region19: #{tpu_custom_call.1} parent=11 // pred_region
          _
        $region20: #{tpu_custom_call.1} parent=11 // pred_fallthru
          _
      $region12: #{tpu_custom_call.1} parent=5 // pred_fallthru
        _
      %p228 = scmp.lt.s32.totalorder %s21, 2
      // Predicated region
      $region21: #{tpu_custom_call.1} parent=5 // pred_check
        %p229 = pneg %p228
      $region22: #{tpu_custom_call.1} parent=5 // pred_check_branch
        %231 = sbr.rel (%p229) target = $region24
      $region23: #{tpu_custom_call.1} parent=5 // pred_region
        // Predicated region
        $region25: #{tpu_custom_call.1} parent=23 // pred_check
          %p232 = pneg %p62
        $region26: #{tpu_custom_call.1} parent=23 // pred_check_branch
          %234 = sbr.rel (%p232) target = $region28
        $region27: #{tpu_custom_call.1} parent=23 // pred_region
          %s235 = sand.u32 %s52, 1
          %s236 = scalar_lea.sflag [#allocation4], %s235
          %s237 = sand.u32 %s52, 1
          %s238 = smul.addr %s237, 16
          %s239 = scalar_lea.vmem [#allocation3], %s238
          %s240 = smul.u32 2, %s30
          %242 = vsyncadd %s236, 0
          %s243 = smul.addr %s28, 2
          %s244 = sadd.s32 %s240, %s243
          %s245 = smul.addr %s244, 8
          %s246 = scalar_lea.hbm %s0, %s245
          %s247 = sshll.u32 %s246, 4
          %s248 = int_to_ptr.hbm [resolvable:$true] %s247
          %s249 = sshll.u32 %s239, 4
          %s250 = int_to_ptr.vmem [resolvable:$true] %s249
          %255 = dma.hbm_to_vmem [thread:$0]  %s248, 256, %s250, %s236, 128, 128, 8
        $region28: #{tpu_custom_call.1} parent=23 // pred_fallthru
          _
        // Predicated region
        $region29: #{tpu_custom_call.1} parent=23 // pred_check
          %p256 = pneg %p90
        $region30: #{tpu_custom_call.1} parent=23 // pred_check_branch
          %258 = sbr.rel (%p256) target = $region32
        $region31: #{tpu_custom_call.1} parent=23 // pred_region
          %s259 = sand.u32 %s21, 1
          %s260 = scalar_lea.sflag [#allocation7], %s259
          %s261 = sand.u32 %s80, 1
          %s262 = smul.addr %s261, 16
          %s263 = scalar_lea.vmem [#allocation6], %s262
          %s264 = smul.u32 2, %s29
          %266 = vsyncadd %s260, 0
          %s267 = smul.addr %s28, 2
          %s268 = sadd.s32 %s264, %s267
          %s269 = smul.addr %s268, 8
          %s270 = scalar_lea.hbm %s1, %s269
          %s271 = sshll.u32 %s270, 4
          %s272 = int_to_ptr.hbm [resolvable:$true] %s271
          %s273 = sshll.u32 %s263, 4
          %s274 = int_to_ptr.vmem [resolvable:$true] %s273
          %279 = dma.hbm_to_vmem [thread:$0]  %s272, 256, %s274, %s260, 128, 128, 8
        $region32: #{tpu_custom_call.1} parent=23 // pred_fallthru
          _
        // Predicated region
        $region33: #{tpu_custom_call.1} parent=23 // pred_check
          %p280 = pneg %p120
        $region34: #{tpu_custom_call.1} parent=23 // pred_check_branch
          %282 = sbr.rel (%p280) target = $region36
        $region35: #{tpu_custom_call.1} parent=23 // pred_region
          %s283 = sand.u32 %s21, 1
          %s284 = scalar_lea.sflag [#allocation7], %s283
          %s285 = sand.u32 %s110, 1
          %s286 = smul.addr %s285, 16
          %s287 = scalar_lea.vmem [#allocation8], %s286
          %s288 = smul.u32 2, %s29
          %290 = vsyncadd %s284, 0
          %s291 = sadd.s32 %s30, %s288
          %s292 = smul.addr %s28, 2
          %s293 = sadd.s32 %s291, %s292
          %s294 = smul.addr %s293, 8
          %s295 = scalar_lea.hbm %s2, %s294
          %s296 = sshll.u32 %s295, 4
          %s297 = int_to_ptr.hbm [resolvable:$true] %s296
          %s298 = sshll.u32 %s287, 4
          %s299 = int_to_ptr.vmem [resolvable:$true] %s298
          %304 = dma.hbm_to_vmem [thread:$0]  %s297, 256, %s299, %s284, 128, 128, 8
        $region36: #{tpu_custom_call.1} parent=23 // pred_fallthru
          _
      $region24: #{tpu_custom_call.1} parent=5 // pred_fallthru
        _
      %p305 = scmp.le.s32.totalorder 1, %s21
      %p306 = scmp.lt.s32.totalorder %s21, 3
      %p307 = pnand %p305, %p306
      %p308 = pneg %p307
      // Predicated region
      $region37: #{tpu_custom_call.1} parent=5 // pred_check
        _
      $region38: #{tpu_custom_call.1} parent=5 // pred_check_branch
        %310 = sbr.rel (%p307) target = $region40
      $region39: #{tpu_custom_call.1} parent=5 // pred_region
        %s311 = ssub.s32 %s21, 1
        %s312 = sand.u32 %s55, 1
        %s313 = scalar_lea.sflag [#allocation4], %s312
        %s314 = sand.u32 %s55, 1
        %s315 = smul.addr %s314, 16
        %s316 = scalar_lea.vmem [#allocation3], %s315
        // Predicated region
        $region41: #{tpu_custom_call.1} parent=39 // pred_check
          %p317 = pneg %p68
        $region42: #{tpu_custom_call.1} parent=39 // pred_check_branch
          %319 = sbr.rel (%p317) target = $region44
        $region43: #{tpu_custom_call.1} parent=39 // pred_region
          %321 = dma.done %s313, 256
        $region44: #{tpu_custom_call.1} parent=39 // pred_fallthru
          _
        %s322 = sand.u32 %s26, 1
        %s323 = scalar_lea.sflag [#allocation7], %s322
        %s324 = sand.u32 %s83, 1
        %s325 = smul.addr %s324, 16
        %s326 = scalar_lea.vmem [#allocation6], %s325
        // Predicated region
        $region45: #{tpu_custom_call.1} parent=39 // pred_check
          %p327 = pneg %p96
        $region46: #{tpu_custom_call.1} parent=39 // pred_check_branch
          %329 = sbr.rel (%p327) target = $region48
        $region47: #{tpu_custom_call.1} parent=39 // pred_region
          %331 = dma.done %s323, 256
        $region48: #{tpu_custom_call.1} parent=39 // pred_fallthru
          _
        %s332 = sand.u32 %s26, 1
        %s333 = scalar_lea.sflag [#allocation7], %s332
        %s334 = sand.u32 %s113, 1
        %s335 = smul.addr %s334, 16
        %s336 = scalar_lea.vmem [#allocation8], %s335
        // Predicated region
        $region49: #{tpu_custom_call.1} parent=39 // pred_check
          %p337 = pneg %p126
        $region50: #{tpu_custom_call.1} parent=39 // pred_check_branch
          %339 = sbr.rel (%p337) target = $region52
        $region51: #{tpu_custom_call.1} parent=39 // pred_region
          %341 = dma.done %s333, 256
        $region52: #{tpu_custom_call.1} parent=39 // pred_fallthru
          _
        // Predicated region
        $region53: #{tpu_custom_call.1} parent=39 // pred_check
          %p342 = pneg %p147
        $region54: #{tpu_custom_call.1} parent=39 // pred_check_branch
          %344 = sbr.rel (%p342) target = $region56
        $region55: #{tpu_custom_call.1} parent=39 // pred_region
          %346 = dma.done [#allocation10], 512
        $region56: #{tpu_custom_call.1} parent=39 // pred_fallthru
          _
        %s347 = sand.u32 %s55, 1
        %s348 = scalar_lea.sflag [#allocation4], %s347
        %s349 = sand.u32 %s55, 1
        %s350 = smul.addr %s349, 16
        %s351 = scalar_lea.vmem [#allocation3], %s350
        %p352 = pneg %p68
        %p353 = pneg %p65
        %s354 = sand.u32 %s26, 1
        %s355 = scalar_lea.sflag [#allocation7], %s354
        %s356 = sand.u32 %s83, 1
        %s357 = smul.addr %s356, 16
        %s358 = scalar_lea.vmem [#allocation6], %s357
        %p359 = pneg %p96
        %p360 = pneg %p93
        %s361 = sand.u32 %s26, 1
        %s362 = scalar_lea.sflag [#allocation7], %s361
        %s363 = sand.u32 %s113, 1
        %s364 = smul.addr %s363, 16
        %s365 = scalar_lea.vmem [#allocation8], %s364
        %p366 = pneg %p126
        %p367 = pneg %p123
        %p368 = pneg %p147
        %p369 = pneg %p144
        %p370 = pneg %p168
        %p371 = pneg %p165
        %p372 = pneg %p196
        %p373 = pneg %p193
        %s374 = sand.u32 %s183, 1
        %s375 = scalar_lea.sflag [#allocation5], %s374
        %s376 = sand.u32 %s183, 1
        %s377 = smul.addr %s376, 16
        %s378 = scalar_lea.vmem [#allocation11], %s377
        %s379 = smul.u32 2, %s33
        %s380 = smul.u32 2, %s32
        %s381 = smul.u32 2, %s32
        %s382 = smul.u32 2, %s32
        %p383 = scmp.eq.s32.totalorder %s33, 0
        // Predicated region
        $region57: #{tpu_custom_call.1} parent=39 // pred_check
          %p384 = pneg %p383
        $region58: #{tpu_custom_call.1} parent=39 // pred_check_branch
          %386 = sbr.rel (%p384) target = $region60
        $region59: #{tpu_custom_call.1} parent=39 // pred_region
          %v387 = vld [vmem:[%s4] sm:$0x1]
          %v388 = vld [vmem:[%s326] sm:$0xff]
          %v389 = vld [vmem:[%s326 + $0x8] sm:$0xff]
          %v390 = vld [vmem:[#allocation9] sm:$0xff]
          %v391 = vld [vmem:[#allocation9 + $0x8] sm:$0xff]
          %v392 = vld [vmem:[#allocation9 + $0x10] sm:$0xff]
          %v393 = vld [vmem:[#allocation9 + $0x18] sm:$0xff]
          %vm394 = vcmask 261120
          %v396 = vsel %vm394, %v388, 0
          %v399 = vsel %vm394, %v389, 0
          %401 = vmatpush.msra.mxu0 0.0
          %402 = vmatpush.msra.mxu0 0.0
          %403 = vmatpush.msra.mxu0 0.0
          %404 = vmatpush.msra.mxu0 0.0
          %405 = vmatpush.msra.mxu0 0.0
          %406 = vmatpush.msra.mxu0 0.0
          %407 = vmatpush.msra.mxu0 0.0
          %408 = vmatpush.msra.mxu0 0.0
          %409 = vmatpush.msra.mxu0 0.0
          %410 = vmatpush.msra.mxu0 0.0
          %411 = vmatpush.msra.mxu0 0.0
          %412 = vmatpush.msra.mxu0 0.0
          %413 = vmatpush.msra.mxu0 %v393
          %414 = vmatpush.msra.mxu0 %v392
          %415 = vmatpush.msra.mxu0 %v391
          %416 = vmatpush.msra.mxu0 %v390
          %417 = vmatmul.f32.gmra.mxu0 %v396
          %v418 = vpop.f32.mrf.mxu0
          %v419 = vadd.f32 0.0, %v418
          %420 = vmatmul.f32.gmra.mxu0 %v399
          %v421 = vpop.f32.mrf.mxu0
          %v422 = vadd.f32 0.0, %v421
          %423 = vdwg.mxu0
          %v425 = vperm.slane %v387, 0
          %v427 = vadd.f32 %v425, %v419
          %v428 = vadd.f32 %v425, %v422
          %429 = vst.msk [vmem:[#allocation2] sm:$0xff] %vm394, %v427
          %430 = vst.msk [vmem:[#allocation2 + $0x8] sm:$0xff] %vm394, %v428
        $region60: #{tpu_custom_call.1} parent=39 // pred_fallthru
          _
        %v431 = vld [vmem:[%s316] sm:$0xff]
        %v432 = vld [vmem:[%s316 + $0x8] sm:$0xff]
        %v433 = vld [vmem:[#allocation9] sm:$0xff]
        %v434 = vld [vmem:[#allocation9 + $0x8] sm:$0xff]
        %v435 = vld [vmem:[#allocation9 + $0x10] sm:$0xff]
        %v436 = vld [vmem:[#allocation9 + $0x18] sm:$0xff]
        %vm437 = vcmask 261120
        %v439 = vsel %vm437, %v431, 0
        %v442 = vsel %vm437, %v432, 0
        %444 = vmatpush.msra.mxu0 0.0
        %445 = vmatpush.msra.mxu0 0.0
        %446 = vmatpush.msra.mxu0 0.0
        %447 = vmatpush.msra.mxu0 0.0
        %448 = vmatpush.msra.mxu0 0.0
        %449 = vmatpush.msra.mxu0 0.0
        %450 = vmatpush.msra.mxu0 0.0
        %451 = vmatpush.msra.mxu0 0.0
        %452 = vmatpush.msra.mxu0 0.0
        %453 = vmatpush.msra.mxu0 0.0
        %454 = vmatpush.msra.mxu0 0.0
        %455 = vmatpush.msra.mxu0 0.0
        %456 = vmatpush.msra.mxu0 %v436
        %457 = vmatpush.msra.mxu0 %v435
        %458 = vmatpush.msra.mxu0 %v434
        %459 = vmatpush.msra.mxu0 %v433
        %460 = vmatmul.f32.gmra.mxu0 %v439
        %v461 = vpop.f32.mrf.mxu0
        %v462 = vadd.f32 0.0, %v461
        %463 = vmatmul.f32.gmra.mxu0 %v442
        %v464 = vpop.f32.mrf.mxu0
        %v465 = vadd.f32 0.0, %v464
        %466 = vdwg.mxu0
        %v467 = vld [vmem:[#allocation2] sm:$0xff]
        %v468 = vld [vmem:[#allocation2 + $0x8] sm:$0xff]
        %v469 = vld [vmem:[%s336] sm:$0xff]
        %v470 = vld [vmem:[%s336 + $0x8] sm:$0xff]
        %vm471 = vcmask 130048
        %v473 = vsel %vm471, %v469, 0
        %v476 = vsel %vm471, %v470, 0
        %478 = vmatpush.msra.mxu0 0.0
        %479 = vmatpush.msra.mxu0 0.0
        %480 = vmatpush.msra.mxu0 0.0
        %481 = vmatpush.msra.mxu0 0.0
        %482 = vmatpush.msra.mxu0 0.0
        %483 = vmatpush.msra.mxu0 0.0
        %484 = vmatpush.msra.mxu0 0.0
        %485 = vmatpush.msra.mxu0 0.0
        %486 = vmatpush.msra.mxu0 0.0
        %487 = vmatpush.msra.mxu0 0.0
        %488 = vmatpush.msra.mxu0 0.0
        %489 = vmatpush.msra.mxu0 0.0
        %490 = vmatpush.msra.mxu0 0.0
        %491 = vmatpush.msra.mxu0 0.0
        %492 = vmatpush.msra.mxu0 %v465
        %493 = vmatpush.msra.mxu0 %v462
        %494 = vmatmul.f32.gmra.mxu0 %v473
        %v495 = vpop.f32.mrf.mxu0
        %v496 = vadd.f32 0.0, %v495
        %497 = vmatmul.f32.gmra.mxu0 %v476
        %v498 = vpop.f32.mrf.mxu0
        %v499 = vadd.f32 0.0, %v498
        %500 = vdwg.mxu0
        %v501 = vadd.f32 %v467, %v496
        %v502 = vadd.f32 %v468, %v499
        %503 = vst.msk [vmem:[#allocation2] sm:$0xff] %vm437, %v501
        %504 = vst.msk [vmem:[#allocation2 + $0x8] sm:$0xff] %vm437, %v502
        // Predicated region
        $region61: #{tpu_custom_call.1} parent=39 // pred_check
          %p505 = pneg %p383
        $region62: #{tpu_custom_call.1} parent=39 // pred_check_branch
          %507 = sbr.rel (%p505) target = $region64
        $region63: #{tpu_custom_call.1} parent=39 // pred_region
          %v508 = vld [vmem:[#allocation2] sm:$0xff]
          %v509 = vld [vmem:[#allocation2 + $0x8] sm:$0xff]
          %510 = vst.msk [vmem:[%s378] sm:$0xff] %vm437, %v508
          %511 = vst.msk [vmem:[%s378 + $0x8] sm:$0xff] %vm437, %v509
        $region64: #{tpu_custom_call.1} parent=39 // pred_fallthru
          _
        %s512 = sand.u32 %s183, 1
        %s513 = scalar_lea.sflag [#allocation5], %s512
        %s514 = sand.u32 %s183, 1
        %s515 = smul.addr %s514, 16
        %s516 = scalar_lea.vmem [#allocation11], %s515
        // Predicated region
        $region65: #{tpu_custom_call.1} parent=39 // pred_check
          %p517 = pneg %p193
        $region66: #{tpu_custom_call.1} parent=39 // pred_check_branch
          %519 = sbr.rel (%p517) target = $region68
        $region67: #{tpu_custom_call.1} parent=39 // pred_region
          %s520 = smul.u32 2, %s32
          %522 = vsyncadd %s513, 0
          %s523 = smul.addr %s31, 2
          %s524 = sadd.s32 %s520, %s523
          %s525 = smul.addr %s524, 8
          %s526 = scalar_lea.hbm %s5, %s525
          %s527 = sshll.u32 %s516, 4
          %s528 = int_to_ptr.vmem [resolvable:$true] %s527
          %s529 = sshll.u32 %s526, 4
          %s530 = int_to_ptr.hbm [resolvable:$true] %s529
          %535 = dma.vmem_to_hbm [thread:$0]  %s528, 256, %s530, %s513, 128, 128, 8
        $region68: #{tpu_custom_call.1} parent=39 // pred_fallthru
          _
      $region40: #{tpu_custom_call.1} parent=5 // pred_fallthru
        _
      %p536 = scmp.le.s32.totalorder 2, %s21
      // Predicated region
      $region69: #{tpu_custom_call.1} parent=5 // pred_check
        %p537 = pneg %p536
      $region70: #{tpu_custom_call.1} parent=5 // pred_check_branch
        %539 = sbr.rel (%p537) target = $region72
      $region71: #{tpu_custom_call.1} parent=5 // pred_region
        %s540 = ssub.s32 %s21, 2
        // Predicated region
        $region73: #{tpu_custom_call.1} parent=71 // pred_check
          %p541 = pneg %p199
        $region74: #{tpu_custom_call.1} parent=71 // pred_check_branch
          %543 = sbr.rel (%p541) target = $region76
        $region75: #{tpu_custom_call.1} parent=71 // pred_region
          %s544 = sand.u32 %s184, 1
          %s545 = scalar_lea.sflag [#allocation5], %s544
          %s546 = sand.u32 %s184, 1
          %s547 = smul.addr %s546, 16
          %s548 = scalar_lea.vmem [#allocation11], %s547
          %550 = dma.done %s545, 256
        $region76: #{tpu_custom_call.1} parent=71 // pred_fallthru
          _
      $region72: #{tpu_custom_call.1} parent=5 // pred_fallthru
        _
    $region6: #{tpu_custom_call.1} parent=1 // loop_footer
      %s25 = sadd.s32 1, %s21
    $region7: #{tpu_custom_call.1} parent=1 // loop_footer_branch
      %20 = sbr.rel target = $region3
    $region8: #{tpu_custom_call.1} parent=1 // loop_exit
      _
    %551 = vsyncpa [#allocation4], 1
    %s552 = scalar_lea.sflag [#allocation4], 1
    %553 = vsyncpa %s552, 1
    %554 = vsyncpa [#allocation7], 1
    %s555 = scalar_lea.sflag [#allocation7], 1
    %556 = vsyncpa %s555, 1
    %557 = vsyncpa [#allocation10], 1
    %558 = vsyncpa [#allocation5], 1
    %s559 = scalar_lea.sflag [#allocation5], 1
    %560 = vsyncpa %s559, 1

</llo_original>
